<compile_context>
chip_gen: v7x
topology: tpu7x:2x2x1
jax: 0.10.0
libtpu: 0.0.40
codegen_flags: <defaults>
</compile_context>

<pallas_src>
import math
import functools

import jax
import jax.numpy as jnp
from jax import lax
from jax.experimental import pallas as pl
from jax.experimental.pallas import tpu as pltpu


_INV_SQRT2 = 1.0 / math.sqrt(2.0)
_VMEM_LIMIT_BYTES = 64 * 1024 * 1024    # > v5e 16MiB scoped default, <= v7x physical
_VMEM_TILE_BUDGET = 42 * 1024 * 1024    # explicit tile buffers (double-buffered)


def _round_up(x, m):
    return (x + m - 1) // m * m


def _gelu_exact(z):
    # Exact GELU: 0.5 * z * (1 + erf(z / sqrt(2)))  -- matches F.gelu default.
    return 0.5 * z * (1.0 + lax.erf(z * _INV_SQRT2))


# ---------------------------------------------------------------------------
# Kernel A (preferred): K kept whole.  One MXU pass per output tile,
# bias + GELU fused, direct store (no accumulator scratch, no pl.when).
# ---------------------------------------------------------------------------
def _linear_gelu_kernel_noksplit(x_ref, w_ref, b_ref, o_ref):
    z = jnp.dot(x_ref[...], w_ref[...], preferred_element_type=jnp.float32)
    z = z + b_ref[...]                      # bias is already f32
    o_ref[...] = _gelu_exact(z).astype(o_ref.dtype)


# ---------------------------------------------------------------------------
# Kernel B (fallback): K split across the last grid axis with a VMEM f32
# accumulator.  Only used when K is too large to keep resident.
# ---------------------------------------------------------------------------
def _linear_gelu_kernel_ksplit(x_ref, w_ref, b_ref, o_ref, acc_ref):
    k = pl.program_id(2)

    @pl.when(k == 0)
    def _():
        acc_ref[...] = jnp.zeros_like(acc_ref)

    acc_ref[...] += jnp.dot(
        x_ref[...], w_ref[...], preferred_element_type=jnp.float32
    )

    @pl.when(k == pl.num_programs(2) - 1)
    def _():
        z = acc_ref[...] + b_ref[...]
        o_ref[...] = _gelu_exact(z).astype(o_ref.dtype)


def _choose_tiles(M, N, K, in_item, out_item):
    """Pick large, lane-dense tiles that fit the VMEM budget on every chip."""
    m_cap = _round_up(min(max(M, 8), 512), 8)
    n_full = _round_up(N, 128)

    def est(tm, tn, tk):
        return (2 * (tm * tk + tk * tn) * in_item     # x & w tiles (double-buffered)
                + 2 * tm * tn * out_item              # output tile (double-buffered)
                + tm * tn * 4                         # f32 matmul / gelu temp
                + 4 * tn * 4)                         # bias

    # Path 1: whole K and whole N resident -> weight read from HBM once.
    for tm in (512, 256, 128):
        tm_t = min(tm, m_cap)
        if est(tm_t, n_full, K) <= _VMEM_TILE_BUDGET:
            return tm_t, n_full, K

    # Path 2: whole K resident, N tiled.
    tm = min(256, m_cap)
    for tn in (1024, 512, 256, 128):
        tn_t = min(tn, n_full)
        if est(tm, tn_t, K) <= _VMEM_TILE_BUDGET:
            return tm, tn_t, K

    # Path 3: K split (only for very large K).
    tm = min(256, m_cap)
    tn = min(512, n_full)
    tk = 2048
    while tk > 256 and est(tm, tn, tk) > _VMEM_TILE_BUDGET:
        tk //= 2
    return tm, tn, tk


@functools.partial(jax.jit, static_argnames=("tm", "tn", "tk"))
def _linear_gelu_padded(x2, w_kn, b_2d, *, tm, tn, tk):
    M, K = x2.shape
    N = w_kn.shape[1]
    in_item = x2.dtype.itemsize

    split_k = tk != K
    M_pad = _round_up(M, tm)
    N_pad = _round_up(N, tn)
    K_pad = _round_up(K, tk) if split_k else K

    if M_pad != M or K_pad != K:
        x2 = jnp.pad(x2, ((0, M_pad - M), (0, K_pad - K)))
    if N_pad != N or K_pad != K:
        w_kn = jnp.pad(w_kn, ((0, K_pad - K), (0, N_pad - N)))
    if N_pad != N:
        b_2d = jnp.pad(b_2d, ((0, 0), (0, N_pad - N)))

    cost = pl.CostEstimate(
        flops=2 * M_pad * K_pad * N_pad,
        transcendentals=M_pad * N_pad,            # erf per output element
        bytes_accessed=(M_pad * K_pad + K_pad * N_pad) * in_item
                       + M_pad * N_pad * x2.dtype.itemsize
                       + N_pad * 4,
    )

    if not split_k:
        m_blocks = M_pad // tm
        n_blocks = N_pad // tn
        # m-major streams the weight (m_blocks * K * N bytes); n-major streams
        # x (n_blocks * M * K bytes).  Stream whichever is cheaper.
        n_major = (n_blocks > 1 and m_blocks > 1
                   and n_blocks * M_pad < m_blocks * N_pad)

        if n_major:
            grid = (n_blocks, m_blocks)
            x_spec = pl.BlockSpec((tm, K_pad), lambda j, i: (i, 0))
            w_spec = pl.BlockSpec((K_pad, tn), lambda j, i: (0, j))
            b_spec = pl.BlockSpec((1, tn), lambda j, i: (0, j))
            o_spec = pl.BlockSpec((tm, tn), lambda j, i: (i, j))
        else:
            grid = (m_blocks, n_blocks)
            x_spec = pl.BlockSpec((tm, K_pad), lambda i, j: (i, 0))
            w_spec = pl.BlockSpec((K_pad, tn), lambda i, j: (0, j))
            b_spec = pl.BlockSpec((1, tn), lambda i, j: (0, j))
            o_spec = pl.BlockSpec((tm, tn), lambda i, j: (i, j))

        out = pl.pallas_call(
            _linear_gelu_kernel_noksplit,
            out_shape=jax.ShapeDtypeStruct((M_pad, N_pad), x2.dtype),
            grid_spec=pltpu.PrefetchScalarGridSpec(
                num_scalar_prefetch=0,
                grid=grid,
                in_specs=[x_spec, w_spec, b_spec],
                out_specs=o_spec,
            ),
            compiler_params=pltpu.CompilerParams(
                dimension_semantics=("parallel", "parallel"),
                vmem_limit_bytes=_VMEM_LIMIT_BYTES,
            ),
            cost_estimate=cost,
        )(x2, w_kn, b_2d)
    else:
        out = pl.pallas_call(
            _linear_gelu_kernel_ksplit,
            out_shape=jax.ShapeDtypeStruct((M_pad, N_pad), x2.dtype),
            grid_spec=pltpu.PrefetchScalarGridSpec(
                num_scalar_prefetch=0,
                grid=(M_pad // tm, N_pad // tn, K_pad // tk),
                in_specs=[
                    pl.BlockSpec((tm, tk), lambda i, j, k: (i, k)),
                    pl.BlockSpec((tk, tn), lambda i, j, k: (k, j)),
                    pl.BlockSpec((1, tn), lambda i, j, k: (0, j)),
                ],
                out_specs=pl.BlockSpec((tm, tn), lambda i, j, k: (i, j)),
                scratch_shapes=[pltpu.VMEM((tm, tn), jnp.float32)],
            ),
            compiler_params=pltpu.CompilerParams(
                dimension_semantics=("parallel", "parallel", "arbitrary"),
                vmem_limit_bytes=_VMEM_LIMIT_BYTES,
            ),
            cost_estimate=cost,
        )(x2, w_kn, b_2d)

    return out[:M, :N]


def prepare_params(weight, bias):
    """One-time conversion from PyTorch layout: weight (out,in) -> (in,out),
    bias (out,) -> (1,out) f32.  Do this at module init, NOT per forward."""
    w_kn = jnp.transpose(jnp.asarray(weight))
    b_2d = jnp.asarray(bias).astype(jnp.float32).reshape(1, -1)
    return w_kn, b_2d


def linear_activation(x, w_kn, b_2d, *, tm=None, tn=None, tk=None):
    """Fused linear + bias + exact GELU.

    x:    (..., in_features)
    w_kn: (in_features, out_features)   -- pre-transposed (see prepare_params)
    b_2d: (1, out_features) float32
    returns (..., out_features)
    """
    orig_shape = x.shape
    K = orig_shape[-1]
    N = w_kn.shape[1]
    x2 = x.reshape(-1, K)
    M = x2.shape[0]

    a_tm, a_tn, a_tk = _choose_tiles(M, N, K, x2.dtype.itemsize, x2.dtype.itemsize)
    tm = tm or a_tm
    tn = tn or a_tn
    tk = tk or a_tk

    out = _linear_gelu_padded(x2, w_kn, b_2d, tm=tm, tn=tn, tk=tk)
    return out.reshape(*orig_shape[:-1], N)


class RobertaIntermediatePallas:
    """Mirrors RobertaIntermediate.forward (fused-gelu LinearActivation)."""

    def __init__(self, weight, bias):
        self.w_kn, self.b_2d = prepare_params(weight, bias)

    def __call__(self, hidden_states):
        return linear_activation(hidden_states, self.w_kn, self.b_2d)


def init_params(key, in_features, out_features, dtype=jnp.float32):
    """Deterministic init mimicking LinearActivation.reset_parameters:
    kaiming_uniform_(a=sqrt(5)) -> U(-1/sqrt(fan_in), 1/sqrt(fan_in)),
    same bound for bias."""
    kw, kb = jax.random.split(key)
    bound = 1.0 / math.sqrt(in_features)
    weight = jax.random.uniform(
        kw, (out_features, in_features), dtype=dtype, minval=-bound, maxval=bound
    )
    bias = jax.random.uniform(
        kb, (out_features,), dtype=dtype, minval=-bound, maxval=bound
    )
    return weight, bias


if __name__ == "__main__":
    key = jax.random.PRNGKey(0)
    kx, kp = jax.random.split(key)

    # Small shapes consistent with RobertaIntermediate: hidden -> intermediate.
    batch, seq, hidden, intermediate = 2, 8, 32, 64
    x = jax.random.normal(kx, (batch, seq, hidden), dtype=jnp.float32)
    weight, bias = init_params(kp, hidden, intermediate)

    module = RobertaIntermediatePallas(weight, bias)
    y = module(x)
    y = jax.block_until_ready(y)

    # Reference check in plain JAX (exact gelu, matches F.gelu default).
    ref = jax.nn.gelu(x @ weight.T + bias, approximate=False)
    assert y.shape == (batch, seq, intermediate)
    assert jnp.allclose(y, ref, atol=1e-5, rtol=1e-5)

    print("KERNEL_OK")
</pallas_src>

<mosaic_0001>
module attributes {stable_mosaic.version = 11 : i64} {
  func.func @_linear_gelu_kernel_noksplit(%arg0: i32, %arg1: i32, %arg2: memref<16x32xf32, #tpu.memory_space<vmem>>, %arg3: memref<32x128xf32, #tpu.memory_space<vmem>>, %arg4: memref<1x128xf32, #tpu.memory_space<vmem>>, %arg5: memref<16x128xf32, #tpu.memory_space<vmem>>) attributes {dimension_semantics = [#tpu.dimension_semantics<parallel>, #tpu.dimension_semantics<parallel>], iteration_bounds = array<i64: 1, 1>, scalar_prefetch = 0 : i64, scratch_operands = 0 : i64, tpu.core_type = #tpu.core_type<tc>, window_params = [{transform_indices = @transform_0, window_bounds = array<i64: 16, 32>}, {transform_indices = @transform_1, window_bounds = array<i64: 32, 128>}, {transform_indices = @transform_2, window_bounds = array<i64: 1, 128>}, {transform_indices = @transform_3, window_bounds = array<i64: 16, 128>}]} {
    %c0 = arith.constant 0 : index
    %c0_0 = arith.constant 0 : index
    %0 = vector.load %arg2[%c0, %c0_0] : memref<16x32xf32, #tpu.memory_space<vmem>>, vector<16x32xf32>
    %c0_1 = arith.constant 0 : index
    %c0_2 = arith.constant 0 : index
    %1 = vector.load %arg3[%c0_1, %c0_2] : memref<32x128xf32, #tpu.memory_space<vmem>>, vector<32x128xf32>
    %cst = arith.constant dense<0.000000e+00> : vector<16x128xf32>
    %2 = tpu.matmul %0, %1, %cst {dimension_numbers = #tpu.dot_dimension_numbers<[1], [0], [0], [1], [0, 0, 1, 1], [], []>} : vector<16x32xf32>, vector<32x128xf32>, vector<16x128xf32> -> vector<16x128xf32>
    %c0_3 = arith.constant 0 : index
    %c0_4 = arith.constant 0 : index
    %3 = vector.load %arg4[%c0_3, %c0_4] : memref<1x128xf32, #tpu.memory_space<vmem>>, vector<1x128xf32>
    %4 = vector.broadcast %3 : vector<1x128xf32> to vector<16x128xf32>
    %5 = arith.addf %2, %4 : vector<16x128xf32>
    %cst_5 = arith.constant 5.000000e-01 : f32
    %6 = vector.broadcast %cst_5 : f32 to vector<16x128xf32>
    %7 = arith.mulf %6, %5 : vector<16x128xf32>
    %cst_6 = arith.constant 0.707106769 : f32
    %8 = vector.broadcast %cst_6 : f32 to vector<16x128xf32>
    %9 = arith.mulf %5, %8 : vector<16x128xf32>
    %10 = math.erf %9 : vector<16x128xf32>
    %cst_7 = arith.constant 1.000000e+00 : f32
    %11 = vector.broadcast %cst_7 : f32 to vector<16x128xf32>
    %12 = arith.addf %11, %10 : vector<16x128xf32>
    %13 = arith.mulf %7, %12 : vector<16x128xf32>
    %c0_8 = arith.constant 0 : index
    %c0_9 = arith.constant 0 : index
    %14 = vector.load %arg5[%c0_8, %c0_9] : memref<16x128xf32, #tpu.memory_space<vmem>>, vector<16x128xf32>
    tpu.vector_store %arg5[%c0_8, %c0_9], %13 {strides = array<i32>} : memref<16x128xf32, #tpu.memory_space<vmem>>, vector<16x128xf32>,
    return
  }
  func.func @transform_0(%arg0: i32, %arg1: i32) -> (i32, i32) {
    %c0_i32 = arith.constant 0 : i32
    %c0_i32_0 = arith.constant 0 : i32
    return %arg0, %c0_i32 : i32, i32
  }
  func.func @transform_1(%arg0: i32, %arg1: i32) -> (i32, i32) {
    %c0_i32 = arith.constant 0 : i32
    %c0_i32_0 = arith.constant 0 : i32
    return %c0_i32, %arg1 : i32, i32
  }
  func.func @transform_2(%arg0: i32, %arg1: i32) -> (i32, i32) {
    %c0_i32 = arith.constant 0 : i32
    %c0_i32_0 = arith.constant 0 : i32
    return %c0_i32, %arg1 : i32, i32
  }
  func.func @transform_3(%arg0: i32, %arg1: i32) -> (i32, i32) {
    %c0_i32 = arith.constant 0 : i32
    return %arg0, %arg1 : i32, i32
  }
}

</mosaic_0001>

<llo_original>
// kernel: _linear_gelu_padded.1
$region0: #{_linear_gelu_padded.1}
  #allocation0 [shape = 'u32[]', space=smem, size = 0x4, offset = 0x4, fixed_abs, tag = 'smem constant byte address 0x4 - core index']
  #allocation1 [shape = 'u32[144,128]{1,0:T(1,128)}', space=vmem, size = 0x12000, scoped, tag = 'internal scratch']
  %s0 = inlined_call_operand.hbm [shape: f32[16,32], index: 0, kind: input, shape index: {}]
  %s1 = inlined_call_operand.hbm [shape: f32[32,128], index: 1, kind: input, shape index: {}]
  %s2 = inlined_call_operand.hbm [shape: f32[1,128], index: 2, kind: input, shape index: {}]
  %s3 = inlined_call_operand.hbm [shape: f32[16,128], index: 3, kind: output, shape index: {}]
  %s4 = sld [smem:[#allocation0]]
  $region34: #{_linear_gelu_padded.1} parent=0
    _
  %s6 = ssub.s32 1, %s4
  %s7 = scalar_select 0, %s6, %s4
  $region1: #{_linear_gelu_padded.1} parent=0
    #allocation2 [shape = 'u8[8192]{0}', space=vmem, size = 0x2000, scoped, tag = 'input window, operand 0, single buffered']
    #allocation3 [shape = 's32[1]{0}', space=sflag, size = 0x4, scoped, tag = 'scoped memory for _linear_gelu_padded.1']
    #allocation4 [shape = 's32[1]{0}', space=sflag, size = 0x4, scoped, tag = 'scoped memory for _linear_gelu_padded.1']
    #allocation5 [shape = 'u8[16384]{0}', space=vmem, size = 0x4000, scoped, tag = 'input window, operand 1, single buffered']
    #allocation6 [shape = 's32[1]{0}', space=sflag, size = 0x4, scoped, tag = 'scoped memory for _linear_gelu_padded.1']
    #allocation7 [shape = 'u8[512]{0}', space=vmem, size = 0x400, scoped, tag = 'input window, operand 2, single buffered']
    #allocation8 [shape = 'u8[8192]{0}', space=vmem, size = 0x2000, scoped, tag = 'output window, operand 0, single buffered']
    %8 = vsyncpa [#allocation3], 0
    %9 = vsyncpa [#allocation6], 0
    %10 = vsyncpa [#allocation4], 0
    // Predicated region
    $region2: #{_linear_gelu_padded.1} parent=1 // pred_check
      _
    $region3: #{_linear_gelu_padded.1} parent=1 // pred_check_branch
      %12 = sbr.rel (0) target = $region5
    $region4: #{_linear_gelu_padded.1} parent=1 // pred_region
      %s14 = ssub.s32 256, 256
      %15 = vsyncadd [#allocation3], %s14
      %s16 = sshll.u32 [#allocation2], 4
      %s17 = int_to_ptr.vmem [resolvable:$true] %s16
      %22 = dma.hbm_to_vmem [thread:$0]  %s0, 256, %s17, [#allocation3], 128, 128, 8
    $region5: #{_linear_gelu_padded.1} parent=1 // pred_fallthru
      _
    // Predicated region
    $region6: #{_linear_gelu_padded.1} parent=1 // pred_check
      _
    $region7: #{_linear_gelu_padded.1} parent=1 // pred_check_branch
      %24 = sbr.rel (0) target = $region9
    $region8: #{_linear_gelu_padded.1} parent=1 // pred_region
      %s26 = ssub.s32 512, 512
      %27 = vsyncadd [#allocation6], %s26
      %s28 = sshll.u32 [#allocation5], 4
      %s29 = int_to_ptr.vmem [resolvable:$true] %s28
      %34 = dma.hbm_to_vmem [thread:$0]  %s1, 512, %s29, [#allocation6], 128, 128, 8
    $region9: #{_linear_gelu_padded.1} parent=1 // pred_fallthru
      _
    // Predicated region
    $region10: #{_linear_gelu_padded.1} parent=1 // pred_check
      _
    $region11: #{_linear_gelu_padded.1} parent=1 // pred_check_branch
      %36 = sbr.rel (0) target = $region13
    $region12: #{_linear_gelu_padded.1} parent=1 // pred_region
      %s38 = ssub.s32 16, 16
      %39 = vsyncadd [#allocation6], %s38
      %s41 = sshll.u32 [#allocation7], 4
      %s42 = int_to_ptr.vmem [resolvable:$true] %s41
      %44 = dma.hbm_to_vmem [thread:$0]  %s2, 16, %s42, [#allocation6]
    $region13: #{_linear_gelu_padded.1} parent=1 // pred_fallthru
      _
    // Predicated region
    $region14: #{_linear_gelu_padded.1} parent=1 // pred_check
      _
    $region15: #{_linear_gelu_padded.1} parent=1 // pred_check_branch
      %46 = sbr.rel (0) target = $region17
    $region16: #{_linear_gelu_padded.1} parent=1 // pred_region
      %47 = dma.done [#allocation3], 256
    $region17: #{_linear_gelu_padded.1} parent=1 // pred_fallthru
      _
    // Predicated region
    $region18: #{_linear_gelu_padded.1} parent=1 // pred_check
      _
    $region19: #{_linear_gelu_padded.1} parent=1 // pred_check_branch
      %49 = sbr.rel (0) target = $region21
    $region20: #{_linear_gelu_padded.1} parent=1 // pred_region
      %50 = dma.done [#allocation6], 512
    $region21: #{_linear_gelu_padded.1} parent=1 // pred_fallthru
      _
    // Predicated region
    $region22: #{_linear_gelu_padded.1} parent=1 // pred_check
      _
    $region23: #{_linear_gelu_padded.1} parent=1 // pred_check_branch
      %52 = sbr.rel (0) target = $region25
    $region24: #{_linear_gelu_padded.1} parent=1 // pred_region
      %53 = dma.done [#allocation6], 16
    $region25: #{_linear_gelu_padded.1} parent=1 // pred_fallthru
      _
    %v54 = vld [vmem:[#allocation2] sm:$0xff]
    %v55 = vld [vmem:[#allocation2 + $0x8] sm:$0xff]
    %v56 = vld [vmem:[#allocation5] sm:$0xff]
    %v57 = vld [vmem:[#allocation5 + $0x8] sm:$0xff]
    %v58 = vld [vmem:[#allocation5 + $0x10] sm:$0xff]
    %v59 = vld [vmem:[#allocation5 + $0x18] sm:$0xff]
    %v60 = vld [vmem:[#allocation7] sm:$0x1]
    %v62 = vlaneseq
    %v63 = vshrl.u32 %v62, 7
    %v64 = vsub.s32 0, %v63
    %v65 = vrot.slane %v60, %v64
    %vm67 = vcmask 261120
    %v69 = vsel %vm67, %v54, 0
    %v72 = vsel %vm67, %v55, 0
    %74 = vmatprep.subr.mxu0 0.0
    %75 = vmatpush1.msra.mxu0 %v56
    %76 = vmatprep.subr.mxu0 0.0
    %77 = vmatpush1.msra.mxu0 %v57
    %78 = vmatprep.subr.mxu0 0.0
    %79 = vmatpush1.msra.mxu0 %v58
    %80 = vmatprep.subr.mxu0 0.0
    %81 = vmatpush1.msra.mxu0 %v59
    %82 = vmatprep.subr.mxu0 0.0
    %83 = vmatpush1.msra.mxu0 0.0
    %84 = vmatprep.subr.mxu0 0.0
    %85 = vmatpush1.msra.mxu0 0.0
    %86 = vmatprep.subr.mxu0 0.0
    %87 = vmatpush1.msra.mxu0 0.0
    %88 = vmatprep.subr.mxu0 0.0
    %89 = vmatpush1.msra.mxu0 0.0
    %90 = vmatprep.subr.mxu0 0.0
    %91 = vmatpush1.msra.mxu0 0.0
    %92 = vmatprep.subr.mxu0 0.0
    %93 = vmatpush1.msra.mxu0 0.0
    %94 = vmatprep.subr.mxu0 0.0
    %95 = vmatpush1.msra.mxu0 0.0
    %96 = vmatprep.subr.mxu0 0.0
    %97 = vmatpush1.msra.mxu0 0.0
    %98 = vmatprep.subr.mxu0 0.0
    %99 = vmatpush1.msra.mxu0 0.0
    %100 = vmatprep.subr.mxu0 0.0
    %101 = vmatpush1.msra.mxu0 0.0
    %102 = vmatprep.subr.mxu0 0.0
    %103 = vmatpush1.msra.mxu0 0.0
    %104 = vmatprep.subr.mxu0 0.0
    %105 = vmatpush1.msra.mxu0 0.0
    %106 = vmatprep.subr.mxu0 0.0
    %107 = vmatpush1.msra.mxu0 0.0
    %108 = vmatprep.subr.mxu0 0.0
    %109 = vmatpush1.msra.mxu0 0.0
    %110 = vmatprep.subr.mxu0 0.0
    %111 = vmatpush1.msra.mxu0 0.0
    %112 = vmatprep.subr.mxu0 0.0
    %113 = vmatpush1.msra.mxu0 0.0
    %114 = vmatprep.subr.mxu0 0.0
    %115 = vmatpush1.msra.mxu0 0.0
    %116 = vmatprep.subr.mxu0 0.0
    %117 = vmatpush1.msra.mxu0 0.0
    %118 = vmatprep.subr.mxu0 0.0
    %119 = vmatpush1.msra.mxu0 0.0
    %120 = vmatprep.subr.mxu0 0.0
    %121 = vmatpush1.msra.mxu0 0.0
    %122 = vmatprep.subr.mxu0 0.0
    %123 = vmatpush1.msra.mxu0 0.0
    %124 = vmatprep.subr.mxu0 0.0
    %125 = vmatpush1.msra.mxu0 0.0
    %126 = vmatprep.subr.mxu0 0.0
    %127 = vmatpush1.msra.mxu0 0.0
    %128 = vmatprep.subr.mxu0 0.0
    %129 = vmatpush1.msra.mxu0 0.0
    %130 = vmatprep.subr.mxu0 0.0
    %131 = vmatpush1.msra.mxu0 0.0
    %132 = vmatprep.subr.mxu0 0.0
    %133 = vmatpush1.msra.mxu0 0.0
    %134 = vmatprep.subr.mxu0 0.0
    %135 = vmatpush1.msra.mxu0 0.0
    %136 = vmatprep.subr.mxu0 0.0
    %137 = vmatpush1.msra.mxu0 0.0
    %138 = vmatprep.mubr.f32.mxu0 0.0
    %139 = vmatmul.mubr.f32.gmra.mrb[0].mxu0 %v69
    %v140 = vpop.f32.mrb[0].mxu0
    %v141 = vadd.f32 %v65, %v140
    %v142 = vpop.f32.mrb[0].mxu0
    %143 = vmatprep.mubr.f32.mxu0 0.0
    %144 = vmatmul.mubr.f32.gmra.mrb[0].mxu0 %v72
    %v145 = vpop.f32.mrb[0].mxu0
    %v146 = vadd.f32 %v65, %v145
    %v147 = vpop.f32.mrb[0].mxu0
    %148 = vdwg.mxu0
    %v149 = vmul.f32 %v141, 0.5
    %v150 = vmul.f32 %v146, 0.5
    %v151 = vmul.f32 %v141, 0.70710677
    %v152 = vmul.f32 %v146, 0.70710677
    %v153 = verf.f32.pop %v151
    %v154 = verf.f32.pop %v152
    %v155 = vadd.f32 %v153, 1.0
    %v156 = vadd.f32 %v154, 1.0
    %v157 = vmul.f32 %v149, %v155
    %v158 = vmul.f32 %v150, %v156
    %159 = vst [vmem:[#allocation8] sm:$0xff] %v157
    %160 = vst [vmem:[#allocation8 + $0x8] sm:$0xff] %v158
    // Predicated region
    $region26: #{_linear_gelu_padded.1} parent=1 // pred_check
      _
    $region27: #{_linear_gelu_padded.1} parent=1 // pred_check_branch
      %162 = sbr.rel (0) target = $region29
    $region28: #{_linear_gelu_padded.1} parent=1 // pred_region
      %s164 = ssub.s32 256, 256
      %165 = vsyncadd [#allocation4], %s164
      %s166 = sshll.u32 [#allocation8], 4
      %s167 = int_to_ptr.vmem [resolvable:$true] %s166
      %172 = dma.vmem_to_hbm [thread:$0]  %s167, 256, %s3, [#allocation4], 128, 128, 8
    $region29: #{_linear_gelu_padded.1} parent=1 // pred_fallthru
      _
    // Predicated region
    $region30: #{_linear_gelu_padded.1} parent=1 // pred_check
      _
    $region31: #{_linear_gelu_padded.1} parent=1 // pred_check_branch
      %174 = sbr.rel (0) target = $region33
    $region32: #{_linear_gelu_padded.1} parent=1 // pred_region
      %175 = dma.done [#allocation4], 256
    $region33: #{_linear_gelu_padded.1} parent=1 // pred_fallthru
      _
    %176 = vsyncpa [#allocation3], 1
    %177 = vsyncpa [#allocation6], 1
    %178 = vsyncpa [#allocation4], 1

</llo_original>
